<compile_context>
chip_gen: v5e
topology: v5e:2x2
jax: 0.10.0
libtpu: 0.0.40
codegen_flags: <defaults>
</compile_context>

<pallas_src>
import jax
import jax.numpy as jnp
from jax import lax
from jax.experimental import pallas as pl
from jax.experimental.pallas import tpu as pltpu

_LANES = 128
_MAX_TILE_ROWS = 4096        # up to 4096 x 128 x f32 = 2 MiB per input block
_SUBLANE_MULTIPLE = 32       # covers f32 (8), bf16 (16), int8/fp8 (32) packing
_NUM_CORES = 2               # v7x has 2 TensorCores; harmless on 1-TC chips
_SMALL_FALLBACK_ELEMS = 1024


def _round_up(x, m):
    return ((x + m - 1) // m) * m


def _make_loss_kernel(margin, gamma, total_count, tile_rows):
    """Kernel with static hyper-parameters closed over.

    NOTE: total_count is assumed to fit in int32 (< 2**31 elements).
    """
    margin = float(margin)
    gamma = float(gamma)

    def kernel(p_ref, n_ref, c_ref, o_ref):
        ci = pl.program_id(0)                      # core (parallel) axis
        ti = pl.program_id(1)                      # row-tile (reduction) axis
        gi = ci * pl.num_programs(1) + ti          # global tile index

        # Zero this core's resident accumulator block on its first step.
        @pl.when(ti == 0)
        def _():
            o_ref[...] = jnp.zeros_like(o_ref)

        # Upcast in VMEM; HBM traffic stays in the native dtype.
        p = p_ref[...].astype(jnp.float32)
        n = n_ref[...].astype(jnp.float32)
        conf = c_ref[...].astype(jnp.float32)

        if gamma == 1.0:                           # static branch: skip the pow
            cg = conf
        else:
            cg = jnp.power(conf, jnp.float32(gamma))

        hinge = jnp.maximum(0.0, cg * margin - (p - n))

        # Mask everything past the real element count: the zero padding inside
        # the array, the garbage tail of a partial last block, and whole
        # clamped tiles past the end (index_map clamps; remaining <= 0 there).
        row = lax.broadcasted_iota(jnp.int32, (tile_rows, _LANES), 0)
        lane = lax.broadcasted_iota(jnp.int32, (tile_rows, _LANES), 1)
        rel = row * _LANES + lane                  # tile-local flat index
        remaining = total_count - gi * (tile_rows * _LANES)
        hinge = jnp.where(rel < remaining, hinge, 0.0)

        # Fold the tile's rows into an (8,128) partial sum: elementwise vreg
        # adds (pure VALU); no full-tile-to-scalar XLU reduction per step.
        partial = hinge.reshape(tile_rows // 8, 8, _LANES).sum(axis=0)
        o_ref[...] += partial

    return kernel


def uncertainty_generalized_loss(p_score, n_score, confidence,
                                 margin=1.0, gamma=1.0,
                                 max_tile_rows=_MAX_TILE_ROWS):
    """Returns mean(max(0, confidence**gamma * margin - (p_score - n_score)))."""
    shape = jnp.broadcast_shapes(p_score.shape, n_score.shape, confidence.shape)
    m = 1
    for d in shape:
        m *= d

    # Tiny inputs: kernel launch + layout plumbing is not worth it.
    if m < _SMALL_FALLBACK_ELEMS:
        p = p_score.astype(jnp.float32)
        n = n_score.astype(jnp.float32)
        c = confidence.astype(jnp.float32)
        hinge = jnp.maximum(0.0, c ** float(gamma) * float(margin) - (p - n))
        return jnp.mean(jnp.broadcast_to(hinge, shape))

    # TODO(synk): lower-rank operands (e.g. per-sample confidence) are still
    # materialized via broadcast_to; broadcasting inside the kernel from the
    # native shape would cut that operand's HBM traffic further.
    def prep(x):
        if x.shape != shape:
            x = jnp.broadcast_to(x, shape)
        x = x.reshape(-1)
        pad = (-m) % _LANES
        if pad:                                    # skip jnp.pad when aligned
            x = jnp.pad(x, (0, pad))
        return x.reshape(-1, _LANES)               # lane-dense [rows, 128]

    p2, n2, c2 = prep(p_score), prep(n_score), prep(confidence)
    rows = p2.shape[0]                             # == cdiv(m, 128)

    tile_rows = min(int(max_tile_rows), _round_up(rows, _SUBLANE_MULTIPLE))
    tile_rows = _round_up(tile_rows, _SUBLANE_MULTIPLE)

    num_tiles = pl.cdiv(rows, tile_rows)
    ncores = min(_NUM_CORES, num_tiles)
    tiles_per_core = pl.cdiv(num_tiles, ncores)

    # Clamp so a core's trailing (empty) tiles re-read the last valid block;
    # the in-kernel mask zeroes their contribution.
    def in_map(ci, ti):
        return (jnp.minimum(ci * tiles_per_core + ti, num_tiles - 1), 0)

    kernel = _make_loss_kernel(margin, gamma, m, tile_rows)

    out = pl.pallas_call(
        kernel,
        out_shape=jax.ShapeDtypeStruct((ncores * 8, _LANES), jnp.float32),
        grid=(ncores, tiles_per_core),
        in_specs=[
            pl.BlockSpec((tile_rows, _LANES), in_map),
            pl.BlockSpec((tile_rows, _LANES), in_map),
            pl.BlockSpec((tile_rows, _LANES), in_map),
        ],
        out_specs=pl.BlockSpec((8, _LANES), lambda ci, ti: (ci, 0)),
        compiler_params=pltpu.CompilerParams(
            dimension_semantics=("parallel", "arbitrary"),
            vmem_limit_bytes=32 * 1024 * 1024),
    )(p2, n2, c2)

    # Final tiny cross-core / cross-lane reduction + mean normalization.
    return jnp.sum(out) * (1.0 / m)


if __name__ == "__main__":
    def ref_loss(p, n, c, margin=1.0, gamma=1.0):
        p = p.astype(jnp.float32)
        n = n.astype(jnp.float32)
        c = c.astype(jnp.float32)
        return jnp.mean(jnp.maximum(0.0, c ** gamma * margin - (p - n)))

    # 1) Tiny shape (batch=2, 8 (pos, neg) score pairs): plain-jnp fast path.
    kp, kn, kc = jax.random.split(jax.random.PRNGKey(0), 3)
    p_s = jax.random.normal(kp, (2, 8), dtype=jnp.float32)
    n_s = jax.random.normal(kn, (2, 8), dtype=jnp.float32)
    conf = jax.random.uniform(kc, (2, 8), dtype=jnp.float32)
    loss1 = uncertainty_generalized_loss(p_s, n_s, conf)
    jax.block_until_ready(loss1)
    ref1 = ref_loss(p_s, n_s, conf)
    assert jnp.allclose(loss1, ref1, atol=1e-5, rtol=1e-5), (loss1, ref1)

    # 2) Pallas path, f32, non-128-aligned size + non-default hyper-params.
    #    Small max_tile_rows forces multiple tiles per core: exercises the 2-D
    #    (core, tile) grid, accumulation, partial last block and tail masking.
    kp, kn, kc = jax.random.split(jax.random.PRNGKey(1), 3)
    p_s = jax.random.normal(kp, (300, 117), dtype=jnp.float32)
    n_s = jax.random.normal(kn, (300, 117), dtype=jnp.float32)
    conf = jax.random.uniform(kc, (300, 117), dtype=jnp.float32)
    loss2 = uncertainty_generalized_loss(p_s, n_s, conf, margin=0.5, gamma=2.0,
                                         max_tile_rows=64)
    jax.block_until_ready(loss2)
    ref2 = ref_loss(p_s, n_s, conf, margin=0.5, gamma=2.0)
    assert jnp.allclose(loss2, ref2, atol=1e-5, rtol=1e-5), (loss2, ref2)

    # 3) Pallas path with native bf16 scores (streamed as bf16, upcast in VMEM).
    kp, kn, kc = jax.random.split(jax.random.PRNGKey(2), 3)
    p_s = jax.random.normal(kp, (64, 512), dtype=jnp.bfloat16)
    n_s = jax.random.normal(kn, (64, 512), dtype=jnp.bfloat16)
    conf = jax.random.uniform(kc, (64, 512), dtype=jnp.float32)
    loss3 = uncertainty_generalized_loss(p_s, n_s, conf, max_tile_rows=64)
    jax.block_until_ready(loss3)
    ref3 = ref_loss(p_s, n_s, conf)
    assert jnp.allclose(loss3, ref3, atol=1e-4, rtol=1e-4), (loss3, ref3)

    # 4) Pallas path at the default (large) tile size, 128-aligned length.
    kp, kn, kc = jax.random.split(jax.random.PRNGKey(3), 3)
    p_s = jax.random.normal(kp, (256, 256), dtype=jnp.float32)
    n_s = jax.random.normal(kn, (256, 256), dtype=jnp.float32)
    conf = jax.random.uniform(kc, (256, 256), dtype=jnp.float32)
    loss4 = uncertainty_generalized_loss(p_s, n_s, conf)
    jax.block_until_ready(loss4)
    ref4 = ref_loss(p_s, n_s, conf)
    assert jnp.allclose(loss4, ref4, atol=1e-5, rtol=1e-5), (loss4, ref4)

    print("KERNEL_OK")
</pallas_src>

<mosaic_0001>
module attributes {stable_mosaic.version = 11 : i64} {
  func.func @kernel(%arg0: i32, %arg1: i32, %arg2: memref<64x128xf32, #tpu.memory_space<vmem>>, %arg3: memref<64x128xf32, #tpu.memory_space<vmem>>, %arg4: memref<64x128xf32, #tpu.memory_space<vmem>>, %arg5: memref<8x128xf32, #tpu.memory_space<vmem>>) attributes {dimension_semantics = [#tpu.dimension_semantics<parallel>, #tpu.dimension_semantics<arbitrary>], iteration_bounds = array<i64: 2, 3>, scalar_prefetch = 0 : i64, scratch_operands = 0 : i64, tpu.core_type = #tpu.core_type<tc>, window_params = [{transform_indices = @transform_0, window_bounds = array<i64: 64, 128>}, {transform_indices = @transform_1, window_bounds = array<i64: 64, 128>}, {transform_indices = @transform_2, window_bounds = array<i64: 64, 128>}, {transform_indices = @transform_3, window_bounds = array<i64: 8, 128>}]} {
    %c3_i32 = arith.constant 3 : i32
    %0 = arith.muli %arg0, %c3_i32 : i32
    %1 = arith.addi %0, %arg1 : i32
    %c0_i32 = arith.constant 0 : i32
    %2 = arith.cmpi eq, %arg1, %c0_i32 : i32
    %3 = arith.extui %2 : i1 to i32
    %c0_i32_0 = arith.constant 0 : i32
    %4 = arith.cmpi ne, %3, %c0_i32_0 : i32
    scf.if %4 {
      %cst_14 = arith.constant 0.000000e+00 : f32
      %32 = vector.broadcast %cst_14 : f32 to vector<8x128xf32>
      %c0_15 = arith.constant 0 : index
      %c0_16 = arith.constant 0 : index
      %33 = vector.load %arg5[%c0_15, %c0_16] : memref<8x128xf32, #tpu.memory_space<vmem>>, vector<8x128xf32>
      tpu.vector_store %arg5[%c0_15, %c0_16], %32 {strides = array<i32>} : memref<8x128xf32, #tpu.memory_space<vmem>>, vector<8x128xf32>,
    } else {
    }
    %c0 = arith.constant 0 : index
    %c0_1 = arith.constant 0 : index
    %5 = vector.load %arg2[%c0, %c0_1] : memref<64x128xf32, #tpu.memory_space<vmem>>, vector<64x128xf32>
    %c0_2 = arith.constant 0 : index
    %c0_3 = arith.constant 0 : index
    %6 = vector.load %arg3[%c0_2, %c0_3] : memref<64x128xf32, #tpu.memory_space<vmem>>, vector<64x128xf32>
    %c0_4 = arith.constant 0 : index
    %c0_5 = arith.constant 0 : index
    %7 = vector.load %arg4[%c0_4, %c0_5] : memref<64x128xf32, #tpu.memory_space<vmem>>, vector<64x128xf32>
    %cst = arith.constant 2.000000e+00 : f32
    %8 = vector.broadcast %cst : f32 to vector<64x128xf32>
    %9 = math.powf %7, %8 : vector<64x128xf32>
    %cst_6 = arith.constant 5.000000e-01 : f32
    %10 = vector.broadcast %cst_6 : f32 to vector<64x128xf32>
    %11 = arith.mulf %9, %10 : vector<64x128xf32>
    %12 = arith.subf %5, %6 : vector<64x128xf32>
    %13 = arith.subf %11, %12 : vector<64x128xf32>
    %cst_7 = arith.constant 0.000000e+00 : f32
    %14 = vector.broadcast %cst_7 : f32 to vector<64x128xf32>
    %15 = arith.maximumf %14, %13 : vector<64x128xf32>
    %16 = tpu.iota {dimensions = array<i32: 0>} : vector<64x128xi32>
    %17 = tpu.iota {dimensions = array<i32: 1>} : vector<64x128xi32>
    %c128_i32 = arith.constant 128 : i32
    %18 = vector.broadcast %c128_i32 : i32 to vector<64x128xi32>
    %19 = arith.muli %16, %18 : vector<64x128xi32>
    %20 = arith.addi %19, %17 : vector<64x128xi32>
    %c8192_i32 = arith.constant 8192 : i32
    %21 = arith.muli %1, %c8192_i32 : i32
    %c35100_i32 = arith.constant 35100 : i32
    %22 = arith.subi %c35100_i32, %21 : i32
    %23 = vector.broadcast %22 : i32 to vector<64x128xi32>
    %24 = arith.cmpi slt, %20, %23 : vector<64x128xi32>
    %cst_8 = arith.constant 0.000000e+00 : f32
    %25 = vector.broadcast %cst_8 : f32 to vector<64x128xf32>
    %26 = arith.select %24, %15, %25 : vector<64x128xi1>, vector<64x128xf32>
    %27 = vector.shape_cast %26 : vector<64x128xf32> to vector<8x8x128xf32>
    %cst_9 = arith.constant dense<0.000000e+00> : vector<8x128xf32>
    %28 = vector.multi_reduction <add>, %27, %cst_9 [0] : vector<8x8x128xf32> to vector<8x128xf32>
    %c0_10 = arith.constant 0 : index
    %c0_11 = arith.constant 0 : index
    %29 = vector.load %arg5[%c0_10, %c0_11] : memref<8x128xf32, #tpu.memory_space<vmem>>, vector<8x128xf32>
    %30 = arith.addf %29, %28 : vector<8x128xf32>
    %c0_12 = arith.constant 0 : index
    %c0_13 = arith.constant 0 : index
    %31 = vector.load %arg5[%c0_12, %c0_13] : memref<8x128xf32, #tpu.memory_space<vmem>>, vector<8x128xf32>
    tpu.vector_store %arg5[%c0_12, %c0_13], %30 {strides = array<i32>} : memref<8x128xf32, #tpu.memory_space<vmem>>, vector<8x128xf32>,
    return
  }
  func.func @transform_0(%arg0: i32, %arg1: i32) -> (i32, i32) {
    %c3_i32 = arith.constant 3 : i32
    %0 = arith.muli %arg0, %c3_i32 : i32
    %1 = arith.addi %0, %arg1 : i32
    %c4_i32 = arith.constant 4 : i32
    %2 = arith.minsi %1, %c4_i32 : i32
    %c0_i32 = arith.constant 0 : i32
    %c0_i32_0 = arith.constant 0 : i32
    return %2, %c0_i32 : i32, i32
  }
  func.func @transform_1(%arg0: i32, %arg1: i32) -> (i32, i32) {
    %c3_i32 = arith.constant 3 : i32
    %0 = arith.muli %arg0, %c3_i32 : i32
    %1 = arith.addi %0, %arg1 : i32
    %c4_i32 = arith.constant 4 : i32
    %2 = arith.minsi %1, %c4_i32 : i32
    %c0_i32 = arith.constant 0 : i32
    %c0_i32_0 = arith.constant 0 : i32
    return %2, %c0_i32 : i32, i32
  }
  func.func @transform_2(%arg0: i32, %arg1: i32) -> (i32, i32) {
    %c3_i32 = arith.constant 3 : i32
    %0 = arith.muli %arg0, %c3_i32 : i32
    %1 = arith.addi %0, %arg1 : i32
    %c4_i32 = arith.constant 4 : i32
    %2 = arith.minsi %1, %c4_i32 : i32
    %c0_i32 = arith.constant 0 : i32
    %c0_i32_0 = arith.constant 0 : i32
    return %2, %c0_i32 : i32, i32
  }
  func.func @transform_3(%arg0: i32, %arg1: i32) -> (i32, i32) {
    %c0_i32 = arith.constant 0 : i32
    %c0_i32_0 = arith.constant 0 : i32
    return %arg0, %c0_i32 : i32, i32
  }
}

</mosaic_0001>

<llo_original>
// kernel: tpu_custom_call.1
$region0: #{tpu_custom_call.1}
  #allocation0 [shape = 'u32[]', space=smem, size = 0x4, offset = 0x4, fixed_abs, tag = 'smem constant byte address 0x4 - core index']
  #allocation1 [shape = 'u32[72,128]{1,0:T(1,128)}', space=vmem, size = 0x9000, scoped, tag = 'internal scratch']
  %s0 = inlined_call_operand.hbm [shape: f32[275,128], index: 0, kind: input, shape index: {}]
  %s1 = inlined_call_operand.hbm [shape: f32[275,128], index: 1, kind: input, shape index: {}]
  %s2 = inlined_call_operand.hbm [shape: f32[275,128], index: 2, kind: input, shape index: {}]
  %s3 = inlined_call_operand.hbm [shape: f32[16,128], index: 3, kind: output, shape index: {}]
  %s4 = sld [smem:[#allocation0]]
  $region61: #{tpu_custom_call.1} parent=0
    _
  %s6 = ssub.s32 1, %s4
  %s7 = scalar_select 0, %s6, %s4
  $region1: #{tpu_custom_call.1} parent=0
    #allocation2 [shape = 'u8[65536]{0}', space=vmem, size = 0x10000, scoped, tag = 'input window, operand 0']
    #allocation3 [shape = 's32[2]{0}', space=sflag, size = 0x8, scoped, tag = 'scoped memory for tpu_custom_call.1']
    #allocation4 [shape = 's32[2]{0}', space=sflag, size = 0x8, scoped, tag = 'scoped memory for tpu_custom_call.1']
    #allocation5 [shape = 'u8[65536]{0}', space=vmem, size = 0x10000, scoped, tag = 'input window, operand 1']
    #allocation6 [shape = 's32[2]{0}', space=sflag, size = 0x8, scoped, tag = 'scoped memory for tpu_custom_call.1']
    #allocation7 [shape = 'u8[65536]{0}', space=vmem, size = 0x10000, scoped, tag = 'input window, operand 2']
    #allocation8 [shape = 'u8[8192]{0}', space=vmem, size = 0x2000, scoped, tag = 'output window, operand 0']
    %8 = vsyncpa [#allocation3], 0
    %s9 = scalar_lea.sflag [#allocation3], 1
    %10 = vsyncpa %s9, 0
    %11 = vsyncpa [#allocation6], 0
    %s12 = scalar_lea.sflag [#allocation6], 1
    %13 = vsyncpa %s12, 0
    %14 = vsyncpa [#allocation4], 0
    %s15 = scalar_lea.sflag [#allocation4], 1
    %16 = vsyncpa %s15, 0
    loop: start=0, step=1, limit=8
    $region2: #{tpu_custom_call.1} parent=1 // loop_pre_header
      _
    $region3: #{tpu_custom_call.1} parent=1 // loop_header
      %s18 = sphi 0, %s22
      %p19 = scmp.ge.s32.totalorder %s18, 8
      %s25 = sphi 0, %s37
      %s26 = sphi 0, %s33
      %s27 = sphi 0, %s25
      %s28 = sphi 0, %s26
      %s29 = sphi 0, %s27
      %s30 = sphi 0, %s28
      %s48 = sphi 0, %s50
      %s51 = sphi 0, %s48
      %s52 = sphi 0, %s51
      %s68 = sphi 0, %s52
      %s82 = sphi 0, %s84
      %s85 = sphi 0, %s82
      %s86 = sphi 0, %s85
      %s102 = sphi 0, %s86
      %s116 = sphi 0, %s118
      %s119 = sphi 0, %s116
      %s120 = sphi 0, %s119
      %s136 = sphi 0, %s120
      %s142 = sphi 0, %s144
      %s145 = sphi 0, %s142
      %s146 = sphi 0, %s145
      %s162 = sphi 0, %s146
    $region4: #{tpu_custom_call.1} parent=1 // loop_header_branch
      %21 = sbr.rel (%p19) target = $region8
    $region5: #{tpu_custom_call.1} parent=1 // loop_body
      %s23 = ssub.s32 %s18, 1
      %s24 = ssub.s32 %s18, 2
      %s31 = sadd.s32 1, %s26
      %p32 = scmp.ge.s32.totalorder %s31, 3
      %s33 = scalar_select %p32, 0, %s31
      %s34 = sadd.s32 1, %s25
      %s35 = scalar_select %p32, %s34, %s25
      %p36 = scmp.ge.s32.totalorder %s35, 2
      %s37 = scalar_select %p36, 0, %s35
      %s38 = smul.u32 %s25, 3
      %s39 = sadd.s32 %s38, %s26
      %p40 = scmp.lt.s32.totalorder %s39, 4
      %s41 = scalar_select %p40, %s39, 4
      %s42 = smul.u32 %s37, 3
      %s43 = sadd.s32 %s42, %s33
      %p44 = scmp.lt.s32.totalorder %s43, 4
      %s45 = scalar_select %p44, %s43, 4
      %s46 = ssub.s32 %s41, %s45
      %p47 = scmp.eq.s32.totalorder %s46, 0
      %s49 = sadd.s32 %s48, 1
      %s50 = scalar_select %p47, %s48, %s49
      %p53 = pneg %p47
      %p54 = scmp.eq.s32.totalorder %s18, 5
      %p55 = por %p53, %p54
      %p56 = scmp.ne.s32.totalorder %s48, %s51
      %p57 = scmp.eq.s32.totalorder %s18, 0
      %p58 = por %p56, %p57
      %p59 = scmp.ne.s32.totalorder %s48, %s51
      %p60 = scmp.eq.s32.totalorder %s23, 5
      %p61 = por %p59, %p60
      %p62 = scmp.ne.s32.totalorder %s51, %s52
      %p63 = scmp.eq.s32.totalorder %s23, 0
      %p64 = por %p62, %p63
      %p65 = scmp.ne.s32.totalorder %s51, %s52
      %p66 = scmp.eq.s32.totalorder %s24, 5
      %p67 = por %p65, %p66
      %p69 = scmp.ne.s32.totalorder %s52, %s68
      %p70 = scmp.eq.s32.totalorder %s24, 0
      %p71 = por %p69, %p70
      %s72 = smul.u32 %s25, 3
      %s73 = sadd.s32 %s72, %s26
      %p74 = scmp.lt.s32.totalorder %s73, 4
      %s75 = scalar_select %p74, %s73, 4
      %s76 = smul.u32 %s37, 3
      %s77 = sadd.s32 %s76, %s33
      %p78 = scmp.lt.s32.totalorder %s77, 4
      %s79 = scalar_select %p78, %s77, 4
      %s80 = ssub.s32 %s75, %s79
      %p81 = scmp.eq.s32.totalorder %s80, 0
      %s83 = sadd.s32 %s82, 1
      %s84 = scalar_select %p81, %s82, %s83
      %p87 = pneg %p81
      %p88 = scmp.eq.s32.totalorder %s18, 5
      %p89 = por %p87, %p88
      %p90 = scmp.ne.s32.totalorder %s82, %s85
      %p91 = scmp.eq.s32.totalorder %s18, 0
      %p92 = por %p90, %p91
      %p93 = scmp.ne.s32.totalorder %s82, %s85
      %p94 = scmp.eq.s32.totalorder %s23, 5
      %p95 = por %p93, %p94
      %p96 = scmp.ne.s32.totalorder %s85, %s86
      %p97 = scmp.eq.s32.totalorder %s23, 0
      %p98 = por %p96, %p97
      %p99 = scmp.ne.s32.totalorder %s85, %s86
      %p100 = scmp.eq.s32.totalorder %s24, 5
      %p101 = por %p99, %p100
      %p103 = scmp.ne.s32.totalorder %s86, %s102
      %p104 = scmp.eq.s32.totalorder %s24, 0
      %p105 = por %p103, %p104
      %s106 = smul.u32 %s25, 3
      %s107 = sadd.s32 %s106, %s26
      %p108 = scmp.lt.s32.totalorder %s107, 4
      %s109 = scalar_select %p108, %s107, 4
      %s110 = smul.u32 %s37, 3
      %s111 = sadd.s32 %s110, %s33
      %p112 = scmp.lt.s32.totalorder %s111, 4
      %s113 = scalar_select %p112, %s111, 4
      %s114 = ssub.s32 %s109, %s113
      %p115 = scmp.eq.s32.totalorder %s114, 0
      %s117 = sadd.s32 %s116, 1
      %s118 = scalar_select %p115, %s116, %s117
      %p121 = pneg %p115
      %p122 = scmp.eq.s32.totalorder %s18, 5
      %p123 = por %p121, %p122
      %p124 = scmp.ne.s32.totalorder %s116, %s119
      %p125 = scmp.eq.s32.totalorder %s18, 0
      %p126 = por %p124, %p125
      %p127 = scmp.ne.s32.totalorder %s116, %s119
      %p128 = scmp.eq.s32.totalorder %s23, 5
      %p129 = por %p127, %p128
      %p130 = scmp.ne.s32.totalorder %s119, %s120
      %p131 = scmp.eq.s32.totalorder %s23, 0
      %p132 = por %p130, %p131
      %p133 = scmp.ne.s32.totalorder %s119, %s120
      %p134 = scmp.eq.s32.totalorder %s24, 5
      %p135 = por %p133, %p134
      %p137 = scmp.ne.s32.totalorder %s120, %s136
      %p138 = scmp.eq.s32.totalorder %s24, 0
      %p139 = por %p137, %p138
      %s140 = ssub.s32 %s25, %s37
      %p141 = scmp.eq.s32.totalorder %s140, 0
      %s143 = sadd.s32 %s142, 1
      %s144 = scalar_select %p141, %s142, %s143
      %p147 = pneg %p141
      %p148 = scmp.eq.s32.totalorder %s18, 5
      %p149 = por %p147, %p148
      %p150 = scmp.ne.s32.totalorder %s142, %s145
      %p151 = scmp.eq.s32.totalorder %s18, 0
      %p152 = por %p150, %p151
      %p153 = scmp.ne.s32.totalorder %s142, %s145
      %p154 = scmp.eq.s32.totalorder %s23, 5
      %p155 = por %p153, %p154
      %p156 = scmp.ne.s32.totalorder %s145, %s146
      %p157 = scmp.eq.s32.totalorder %s23, 0
      %p158 = por %p156, %p157
      %p159 = scmp.ne.s32.totalorder %s145, %s146
      %p160 = scmp.eq.s32.totalorder %s24, 5
      %p161 = por %p159, %p160
      %p163 = scmp.ne.s32.totalorder %s146, %s162
      %p164 = scmp.eq.s32.totalorder %s24, 0
      %p165 = por %p163, %p164
      %p166 = scmp.le.s32.totalorder 1, %s18
      %p167 = scmp.lt.s32.totalorder %s18, 7
      %p168 = pnand %p166, %p167
      %p169 = pneg %p168
      // Predicated region
      $region9: #{tpu_custom_call.1} parent=5 // pred_check
        _
      $region10: #{tpu_custom_call.1} parent=5 // pred_check_branch
        %171 = sbr.rel (%p168) target = $region12
      $region11: #{tpu_custom_call.1} parent=5 // pred_region
        %s172 = ssub.s32 %s18, 1
      $region12: #{tpu_custom_call.1} parent=5 // pred_fallthru
        _
      %p173 = scmp.lt.s32.totalorder %s18, 6
      // Predicated region
      $region13: #{tpu_custom_call.1} parent=5 // pred_check
        %p174 = pneg %p173
      $region14: #{tpu_custom_call.1} parent=5 // pred_check_branch
        %176 = sbr.rel (%p174) target = $region16
      $region15: #{tpu_custom_call.1} parent=5 // pred_region
        // Predicated region
        $region17: #{tpu_custom_call.1} parent=15 // pred_check
          %p177 = pneg %p58
        $region18: #{tpu_custom_call.1} parent=15 // pred_check_branch
          %179 = sbr.rel (%p177) target = $region20
        $region19: #{tpu_custom_call.1} parent=15 // pred_region
          %s180 = sand.u32 %s48, 1
          %s181 = scalar_lea.sflag [#allocation3], %s180
          %s182 = sand.u32 %s48, 1
          %s183 = smul.addr %s182, 64
          %s184 = scalar_lea.vmem [#allocation2], %s183
          %s185 = smul.u32 %s25, 3
          %s186 = sadd.s32 %s185, %s26
          %p187 = scmp.lt.s32.totalorder %s186, 4
          %s188 = scalar_select %p187, %s186, 4
          %s189 = smul.u32 8, %s188
          %s190 = ssub.s32 35, %s189
          %p191 = scmp.lt.s32.totalorder %s190, 8
          %s192 = scalar_select %p191, %s190, 8
          %s193 = smul.u32 8, %s192
          %s194 = ssub.s32 64, %s193
          %s195 = sshll.u32 %s194, 4
          %196 = vsyncadd %s181, %s195
          %p197 = scmp.ne.s32.totalorder 0, %s193
          %s198 = smul.addr %s189, 8
          %s199 = scalar_lea.hbm %s0, %s198
          %s200 = smul.u32 8, %s192
          %s201 = sshll.u32 %s199, 4
          %s202 = int_to_ptr.hbm [resolvable:$true] %s201
          %s203 = sshll.u32 %s184, 4
          %s204 = int_to_ptr.vmem [resolvable:$true] %s203
          %s205 = sshll.u32 %s200, 4
          %209 = dma.hbm_to_vmem [thread:$0]  (%p197), %s202, %s205, %s204, %s181, 128, 128, 8
        $region20: #{tpu_custom_call.1} parent=15 // pred_fallthru
          _
        // Predicated region
        $region21: #{tpu_custom_call.1} parent=15 // pred_check
          %p210 = pneg %p92
        $region22: #{tpu_custom_call.1} parent=15 // pred_check_branch
          %212 = sbr.rel (%p210) target = $region24
        $region23: #{tpu_custom_call.1} parent=15 // pred_region
          %s213 = sand.u32 %s18, 1
          %s214 = scalar_lea.sflag [#allocation6], %s213
          %s215 = sand.u32 %s82, 1
          %s216 = smul.addr %s215, 64
          %s217 = scalar_lea.vmem [#allocation5], %s216
          %s218 = smul.u32 %s25, 3
          %s219 = sadd.s32 %s218, %s26
          %p220 = scmp.lt.s32.totalorder %s219, 4
          %s221 = scalar_select %p220, %s219, 4
          %s222 = smul.u32 8, %s221
          %s223 = ssub.s32 35, %s222
          %p224 = scmp.lt.s32.totalorder %s223, 8
          %s225 = scalar_select %p224, %s223, 8
          %s226 = smul.u32 8, %s225
          %s227 = ssub.s32 64, %s226
          %s228 = sshll.u32 %s227, 4
          %229 = vsyncadd %s214, %s228
          %p230 = scmp.ne.s32.totalorder 0, %s226
          %s231 = smul.addr %s222, 8
          %s232 = scalar_lea.hbm %s1, %s231
          %s233 = smul.u32 8, %s225
          %s234 = sshll.u32 %s232, 4
          %s235 = int_to_ptr.hbm [resolvable:$true] %s234
          %s236 = sshll.u32 %s217, 4
          %s237 = int_to_ptr.vmem [resolvable:$true] %s236
          %s238 = sshll.u32 %s233, 4
          %242 = dma.hbm_to_vmem [thread:$0]  (%p230), %s235, %s238, %s237, %s214, 128, 128, 8
        $region24: #{tpu_custom_call.1} parent=15 // pred_fallthru
          _
        // Predicated region
        $region25: #{tpu_custom_call.1} parent=15 // pred_check
          %p243 = pneg %p126
        $region26: #{tpu_custom_call.1} parent=15 // pred_check_branch
          %245 = sbr.rel (%p243) target = $region28
        $region27: #{tpu_custom_call.1} parent=15 // pred_region
          %s246 = sand.u32 %s18, 1
          %s247 = scalar_lea.sflag [#allocation6], %s246
          %s248 = sand.u32 %s116, 1
          %s249 = smul.addr %s248, 64
          %s250 = scalar_lea.vmem [#allocation7], %s249
          %s251 = smul.u32 %s25, 3
          %s252 = sadd.s32 %s251, %s26
          %p253 = scmp.lt.s32.totalorder %s252, 4
          %s254 = scalar_select %p253, %s252, 4
          %s255 = smul.u32 8, %s254
          %s256 = ssub.s32 35, %s255
          %p257 = scmp.lt.s32.totalorder %s256, 8
          %s258 = scalar_select %p257, %s256, 8
          %s259 = smul.u32 8, %s258
          %s260 = ssub.s32 64, %s259
          %s261 = sshll.u32 %s260, 4
          %262 = vsyncadd %s247, %s261
          %p263 = scmp.ne.s32.totalorder 0, %s259
          %s264 = smul.addr %s255, 8
          %s265 = scalar_lea.hbm %s2, %s264
          %s266 = smul.u32 8, %s258
          %s267 = sshll.u32 %s265, 4
          %s268 = int_to_ptr.hbm [resolvable:$true] %s267
          %s269 = sshll.u32 %s250, 4
          %s270 = int_to_ptr.vmem [resolvable:$true] %s269
          %s271 = sshll.u32 %s266, 4
          %275 = dma.hbm_to_vmem [thread:$0]  (%p263), %s268, %s271, %s270, %s247, 128, 128, 8
        $region28: #{tpu_custom_call.1} parent=15 // pred_fallthru
          _
      $region16: #{tpu_custom_call.1} parent=5 // pred_fallthru
        _
      %p276 = scmp.le.s32.totalorder 1, %s18
      %p277 = scmp.lt.s32.totalorder %s18, 7
      %p278 = pnand %p276, %p277
      %p279 = pneg %p278
      // Predicated region
      $region29: #{tpu_custom_call.1} parent=5 // pred_check
        _
      $region30: #{tpu_custom_call.1} parent=5 // pred_check_branch
        %281 = sbr.rel (%p278) target = $region32
      $region31: #{tpu_custom_call.1} parent=5 // pred_region
        %s282 = ssub.s32 %s18, 1
        %s283 = sand.u32 %s51, 1
        %s284 = scalar_lea.sflag [#allocation3], %s283
        %s285 = sand.u32 %s51, 1
        %s286 = smul.addr %s285, 64
        %s287 = scalar_lea.vmem [#allocation2], %s286
        // Predicated region
        $region33: #{tpu_custom_call.1} parent=31 // pred_check
          %p288 = pneg %p64
        $region34: #{tpu_custom_call.1} parent=31 // pred_check_branch
          %290 = sbr.rel (%p288) target = $region36
        $region35: #{tpu_custom_call.1} parent=31 // pred_region
          %292 = dma.done %s284, 1024
        $region36: #{tpu_custom_call.1} parent=31 // pred_fallthru
          _
        %s293 = sand.u32 %s23, 1
        %s294 = scalar_lea.sflag [#allocation6], %s293
        %s295 = sand.u32 %s85, 1
        %s296 = smul.addr %s295, 64
        %s297 = scalar_lea.vmem [#allocation5], %s296
        // Predicated region
        $region37: #{tpu_custom_call.1} parent=31 // pred_check
          %p298 = pneg %p98
        $region38: #{tpu_custom_call.1} parent=31 // pred_check_branch
          %300 = sbr.rel (%p298) target = $region40
        $region39: #{tpu_custom_call.1} parent=31 // pred_region
          %302 = dma.done %s294, 1024
        $region40: #{tpu_custom_call.1} parent=31 // pred_fallthru
          _
        %s303 = sand.u32 %s23, 1
        %s304 = scalar_lea.sflag [#allocation6], %s303
        %s305 = sand.u32 %s119, 1
        %s306 = smul.addr %s305, 64
        %s307 = scalar_lea.vmem [#allocation7], %s306
        // Predicated region
        $region41: #{tpu_custom_call.1} parent=31 // pred_check
          %p308 = pneg %p132
        $region42: #{tpu_custom_call.1} parent=31 // pred_check_branch
          %310 = sbr.rel (%p308) target = $region44
        $region43: #{tpu_custom_call.1} parent=31 // pred_region
          %312 = dma.done %s304, 1024
        $region44: #{tpu_custom_call.1} parent=31 // pred_fallthru
          _
        %s313 = sand.u32 %s51, 1
        %s314 = scalar_lea.sflag [#allocation3], %s313
        %s315 = sand.u32 %s51, 1
        %s316 = smul.addr %s315, 64
        %s317 = scalar_lea.vmem [#allocation2], %s316
        %p318 = pneg %p64
        %p319 = pneg %p61
        %s320 = sand.u32 %s23, 1
        %s321 = scalar_lea.sflag [#allocation6], %s320
        %s322 = sand.u32 %s85, 1
        %s323 = smul.addr %s322, 64
        %s324 = scalar_lea.vmem [#allocation5], %s323
        %p325 = pneg %p98
        %p326 = pneg %p95
        %s327 = sand.u32 %s23, 1
        %s328 = scalar_lea.sflag [#allocation6], %s327
        %s329 = sand.u32 %s119, 1
        %s330 = smul.addr %s329, 64
        %s331 = scalar_lea.vmem [#allocation7], %s330
        %p332 = pneg %p132
        %p333 = pneg %p129
        %p334 = pneg %p158
        %p335 = pneg %p155
        %s336 = sand.u32 %s145, 1
        %s337 = scalar_lea.sflag [#allocation4], %s336
        %s338 = sand.u32 %s145, 1
        %s339 = smul.addr %s338, 8
        %s340 = scalar_lea.vmem [#allocation8], %s339
        %s341 = smul.u32 %s27, 3
        %s342 = sadd.s32 %s341, %s28
        %p343 = scmp.lt.s32.totalorder %s342, 4
        %s344 = scalar_select %p343, %s342, 4
        %s345 = smul.u32 8, %s344
        %s346 = ssub.s32 35, %s345
        %p347 = scmp.lt.s32.totalorder %s346, 8
        %s348 = scalar_select %p347, %s346, 8
        %s349 = smul.u32 8, %s348
        %s350 = smul.u32 %s27, 3
        %s351 = sadd.s32 %s350, %s28
        %p352 = scmp.lt.s32.totalorder %s351, 4
        %s353 = scalar_select %p352, %s351, 4
        %s354 = smul.u32 8, %s353
        %s355 = ssub.s32 35, %s354
        %p356 = scmp.lt.s32.totalorder %s355, 8
        %s357 = scalar_select %p356, %s355, 8
        %s358 = smul.u32 8, %s357
        %s359 = smul.u32 %s27, 3
        %s360 = sadd.s32 %s359, %s28
        %p361 = scmp.lt.s32.totalorder %s360, 4
        %s362 = scalar_select %p361, %s360, 4
        %s363 = smul.u32 8, %s362
        %s364 = ssub.s32 35, %s363
        %p365 = scmp.lt.s32.totalorder %s364, 8
        %s366 = scalar_select %p365, %s364, 8
        %s367 = smul.u32 8, %s366
        %s368 = smul.u32 %s27, 3
        %s369 = sadd.s32 %s368, %s28
        %p370 = scmp.eq.s32.totalorder %s28, 0
        // Predicated region
        $region45: #{tpu_custom_call.1} parent=31 // pred_check
          %p371 = pneg %p370
        $region46: #{tpu_custom_call.1} parent=31 // pred_check_branch
          %373 = sbr.rel (%p371) target = $region48
        $region47: #{tpu_custom_call.1} parent=31 // pred_region
          %374 = vst [vmem:[%s340] sm:$0xff] 0.0
        $region48: #{tpu_custom_call.1} parent=31 // pred_fallthru
          _
        %v375 = vld [vmem:[%s287] sm:$0xff]
        %v376 = vld [vmem:[%s287 + $0x8] sm:$0xff]
        %v377 = vld [vmem:[%s287 + $0x10] sm:$0xff]
        %v378 = vld [vmem:[%s287 + $0x18] sm:$0xff]
        %v379 = vld [vmem:[%s287 + $0x20] sm:$0xff]
        %v380 = vld [vmem:[%s287 + $0x28] sm:$0xff]
        %v381 = vld [vmem:[%s287 + $0x30] sm:$0xff]
        %v382 = vld [vmem:[%s287 + $0x38] sm:$0xff]
        %v383 = vld [vmem:[%s297] sm:$0xff]
        %v384 = vld [vmem:[%s297 + $0x8] sm:$0xff]
        %v385 = vld [vmem:[%s297 + $0x10] sm:$0xff]
        %v386 = vld [vmem:[%s297 + $0x18] sm:$0xff]
        %v387 = vld [vmem:[%s297 + $0x20] sm:$0xff]
        %v388 = vld [vmem:[%s297 + $0x28] sm:$0xff]
        %v389 = vld [vmem:[%s297 + $0x30] sm:$0xff]
        %v390 = vld [vmem:[%s297 + $0x38] sm:$0xff]
        %v391 = vld [vmem:[%s307] sm:$0xff]
        %v392 = vld [vmem:[%s307 + $0x8] sm:$0xff]
        %v393 = vld [vmem:[%s307 + $0x10] sm:$0xff]
        %v394 = vld [vmem:[%s307 + $0x18] sm:$0xff]
        %v395 = vld [vmem:[%s307 + $0x20] sm:$0xff]
        %v396 = vld [vmem:[%s307 + $0x28] sm:$0xff]
        %v397 = vld [vmem:[%s307 + $0x30] sm:$0xff]
        %v398 = vld [vmem:[%s307 + $0x38] sm:$0xff]
        %v399 = vpow.f32 %v391, 2.0
        %v400 = vpow.f32 %v392, 2.0
        %v401 = vpow.f32 %v393, 2.0
        %v402 = vpow.f32 %v394, 2.0
        %v403 = vpow.f32 %v395, 2.0
        %v404 = vpow.f32 %v396, 2.0
        %v405 = vpow.f32 %v397, 2.0
        %v406 = vpow.f32 %v398, 2.0
        %v407 = vmul.f32 %v399, 0.5
        %v408 = vmul.f32 %v400, 0.5
        %v409 = vmul.f32 %v401, 0.5
        %v410 = vmul.f32 %v402, 0.5
        %v411 = vmul.f32 %v403, 0.5
        %v412 = vmul.f32 %v404, 0.5
        %v413 = vmul.f32 %v405, 0.5
        %v414 = vmul.f32 %v406, 0.5
        %v415 = vsub.f32 %v375, %v383
        %v416 = vsub.f32 %v376, %v384
        %v417 = vsub.f32 %v377, %v385
        %v418 = vsub.f32 %v378, %v386
        %v419 = vsub.f32 %v379, %v387
        %v420 = vsub.f32 %v380, %v388
        %v421 = vsub.f32 %v381, %v389
        %v422 = vsub.f32 %v382, %v390
        %v423 = vsub.f32 %v407, %v415
        %v424 = vsub.f32 %v408, %v416
        %v425 = vsub.f32 %v409, %v417
        %v426 = vsub.f32 %v410, %v418
        %v427 = vsub.f32 %v411, %v419
        %v428 = vsub.f32 %v412, %v420
        %v429 = vsub.f32 %v413, %v421
        %v430 = vsub.f32 %v414, %v422
        %v431 = vmax.f32 %v423, 0.0
        %v432 = vmax.f32 %v424, 0.0
        %v433 = vmax.f32 %v425, 0.0
        %v434 = vmax.f32 %v426, 0.0
        %v435 = vmax.f32 %v427, 0.0
        %v436 = vmax.f32 %v428, 0.0
        %v437 = vmax.f32 %v429, 0.0
        %v438 = vmax.f32 %v430, 0.0
        %v439 = vlaneseq
        %v440 = vshrl.u32 %v439, 7
        %v441 = vadd.s32 %v440, 8
        %v442 = vadd.s32 %v440, 16
        %v443 = vadd.s32 %v440, 24
        %v444 = vadd.s32 %v440, 32
        %v445 = vadd.s32 %v440, 40
        %v446 = vadd.s32 %v440, 48
        %v447 = vadd.s32 %v440, 56
        %v448 = vlaneseq
        %v449 = vand.u32 %v448, 127
        %v450 = vmul.u32 %v440, 128
        %v451 = vmul.u32 %v441, 128
        %v452 = vmul.u32 %v442, 128
        %v453 = vmul.u32 %v443, 128
        %v454 = vmul.u32 %v444, 128
        %v455 = vmul.u32 %v445, 128
        %v456 = vmul.u32 %v446, 128
        %v457 = vmul.u32 %v447, 128
        %v458 = vadd.s32 %v450, %v449
        %v459 = vadd.s32 %v451, %v449
        %v460 = vadd.s32 %v452, %v449
        %v461 = vadd.s32 %v453, %v449
        %v462 = vadd.s32 %v454, %v449
        %v463 = vadd.s32 %v455, %v449
        %v464 = vadd.s32 %v456, %v449
        %v465 = vadd.s32 %v457, %v449
        %s466 = smul.u32 %s369, 8192
        %s467 = ssub.s32 35100, %s466
        %v468 = vstv %s467
        %vm469 = vcmp.lt.s32.totalorder %v458, %v468
        %vm470 = vcmp.lt.s32.totalorder %v459, %v468
        %vm471 = vcmp.lt.s32.totalorder %v460, %v468
        %vm472 = vcmp.lt.s32.totalorder %v461, %v468
        %vm473 = vcmp.lt.s32.totalorder %v462, %v468
        %vm474 = vcmp.lt.s32.totalorder %v463, %v468
        %vm475 = vcmp.lt.s32.totalorder %v464, %v468
        %vm476 = vcmp.lt.s32.totalorder %v465, %v468
        %v477 = vsel %vm469, %v431, 0.0
        %v478 = vsel %vm470, %v432, 0.0
        %v479 = vsel %vm471, %v433, 0.0
        %v480 = vsel %vm472, %v434, 0.0
        %v481 = vsel %vm473, %v435, 0.0
        %v482 = vsel %vm474, %v436, 0.0
        %v483 = vsel %vm475, %v437, 0.0
        %v484 = vsel %vm476, %v438, 0.0
        %v485 = vadd.f32 %v477, %v478
        %v486 = vadd.f32 %v485, %v479
        %v487 = vadd.f32 %v486, %v480
        %v488 = vadd.f32 %v487, %v481
        %v489 = vadd.f32 %v488, %v482
        %v490 = vadd.f32 %v489, %v483
        %v491 = vadd.f32 %v490, %v484
        %v492 = vld [vmem:[%s340] sm:$0xff]
        %v493 = vadd.f32 %v492, %v491
        %494 = vst [vmem:[%s340] sm:$0xff] %v493
        %s495 = sand.u32 %s145, 1
        %s496 = scalar_lea.sflag [#allocation4], %s495
        %s497 = sand.u32 %s145, 1
        %s498 = smul.addr %s497, 8
        %s499 = scalar_lea.vmem [#allocation8], %s498
        // Predicated region
        $region49: #{tpu_custom_call.1} parent=31 // pred_check
          %p500 = pneg %p155
        $region50: #{tpu_custom_call.1} parent=31 // pred_check_branch
          %502 = sbr.rel (%p500) target = $region52
        $region51: #{tpu_custom_call.1} parent=31 // pred_region
          %504 = vsyncadd %s496, 0
          %s505 = smul.addr %s27, 8
          %s506 = scalar_lea.hbm %s3, %s505
          %s508 = sshll.u32 %s499, 4
          %s509 = int_to_ptr.vmem [resolvable:$true] %s508
          %s510 = sshll.u32 %s506, 4
          %s511 = int_to_ptr.hbm [resolvable:$true] %s510
          %513 = dma.vmem_to_hbm [thread:$0]  %s509, 128, %s511, %s496
        $region52: #{tpu_custom_call.1} parent=31 // pred_fallthru
          _
      $region32: #{tpu_custom_call.1} parent=5 // pred_fallthru
        _
      %p514 = scmp.le.s32.totalorder 2, %s18
      // Predicated region
      $region53: #{tpu_custom_call.1} parent=5 // pred_check
        %p515 = pneg %p514
      $region54: #{tpu_custom_call.1} parent=5 // pred_check_branch
        %517 = sbr.rel (%p515) target = $region56
      $region55: #{tpu_custom_call.1} parent=5 // pred_region
        %s518 = ssub.s32 %s18, 2
        // Predicated region
        $region57: #{tpu_custom_call.1} parent=55 // pred_check
          %p519 = pneg %p161
        $region58: #{tpu_custom_call.1} parent=55 // pred_check_branch
          %521 = sbr.rel (%p519) target = $region60
        $region59: #{tpu_custom_call.1} parent=55 // pred_region
          %s522 = sand.u32 %s146, 1
          %s523 = scalar_lea.sflag [#allocation4], %s522
          %s524 = sand.u32 %s146, 1
          %s525 = smul.addr %s524, 8
          %s526 = scalar_lea.vmem [#allocation8], %s525
          %528 = dma.done %s523, 128
        $region60: #{tpu_custom_call.1} parent=55 // pred_fallthru
          _
      $region56: #{tpu_custom_call.1} parent=5 // pred_fallthru
        _
    $region6: #{tpu_custom_call.1} parent=1 // loop_footer
      %s22 = sadd.s32 1, %s18
    $region7: #{tpu_custom_call.1} parent=1 // loop_footer_branch
      %17 = sbr.rel target = $region3
    $region8: #{tpu_custom_call.1} parent=1 // loop_exit
      _
    %529 = vsyncpa [#allocation3], 1
    %s530 = scalar_lea.sflag [#allocation3], 1
    %531 = vsyncpa %s530, 1
    %532 = vsyncpa [#allocation6], 1
    %s533 = scalar_lea.sflag [#allocation6], 1
    %534 = vsyncpa %s533, 1
    %535 = vsyncpa [#allocation4], 1
    %s536 = scalar_lea.sflag [#allocation4], 1
    %537 = vsyncpa %s536, 1

</llo_original>
